<compile_context>
chip_gen: v5e
topology: v5e:2x2
jax: 0.10.0
libtpu: 0.0.40
codegen_flags: <defaults>
</compile_context>

<pallas_src>
import jax
import jax.numpy as jnp
from jax.experimental import pallas as pl
from jax.experimental.pallas import tpu as pltpu


def _round_up(a: int, b: int) -> int:
    return (a + b - 1) // b * b


def _net_kernel(wb_ref, x_ref, o_ref):
    """o[r, l] = sigmoid(sum_k wb[k] * x[k, r, l] + wb[D]).

    wb_ref : (D+1,)            SMEM  -- weight scalars followed by the bias (f32)
    x_ref  : (D, TILE_R, 128)  VMEM  -- batch packed into (sublane, lane); fully dense
    o_ref  : (TILE_R, 128)     VMEM  -- lane-dense output tile (unmasked stores)
    """
    d = x_ref.shape[0]
    # Unrolled over the tiny static feature dim: plain VPU mul-adds on fully packed
    # (TILE_R, 128) tiles -- no MXU, no XLU reduce, scalar broadcast from SMEM is free.
    z = x_ref[0].astype(jnp.float32) * wb_ref[0]
    for k in range(1, d):
        z = z + x_ref[k].astype(jnp.float32) * wb_ref[k]
    z = z + wb_ref[d]                                   # bias
    o_ref[...] = jax.nn.sigmoid(z).astype(o_ref.dtype)  # exp on the EUP


def net_forward(x, weight, bias, *, target_grid_steps: int = 8,
                max_tile_cols: int = 131072):
    """x: (N, D); weight: (1, D) (PyTorch nn.Linear layout); bias: (1,).

    Returns (N, 1) float32, matching sigmoid(x @ weight.T + bias).
    """
    n, d = x.shape
    assert weight.shape == (1, d) and bias.shape == (1,)

    x_itemsize = jnp.dtype(x.dtype).itemsize
    out_dtype = jnp.float32
    out_itemsize = jnp.dtype(out_dtype).itemsize

    # ---- tiling: pad the batch only to a multiple of 128 (one lane row) ----------
    n_pad = _round_up(n, 128)
    r_total = n_pad // 128                      # rows of 128 samples

    # Generation-aware VMEM budget (v7x: 64 MiB physical / 32 MiB scoped per TC).
    try:
        vmem_cap = int(pltpu.get_tpu_info().vmem_capacity_bytes)
    except Exception:  # be robust if the introspection API is unavailable
        vmem_cap = 64 * 1024 * 1024
    vmem_budget = vmem_cap // 4                 # generous headroom for double buffers

    # Per row-of-128 samples: double-buffered input tile + double-buffered output tile.
    bytes_per_row = 2 * 128 * (d * x_itemsize + out_itemsize)
    cap_r = max(8, vmem_budget // bytes_per_row)

    # Big tiles so per-grid-step overhead is amortized, but aim for ~target_grid_steps
    # steps (an even-ish, >=2 count) so the "parallel" axis can be split across
    # v7x's two TensorCores.
    tile_r = min(cap_r, max_tile_cols // 128,
                 max(1, pl.cdiv(r_total, target_grid_steps)))
    if tile_r >= r_total:
        tile_r = r_total                        # single full-extent block
    else:
        tile_r = min(_round_up(tile_r, 8), r_total)   # (8, 128) block rule
    grid_steps = pl.cdiv(r_total, tile_r)

    # ---- layout plumbing ----------------------------------------------------------
    # Batch into the (sublane, lane) plane: (D, r_total, 128), fully packed.  The HBM
    # read keeps the source dtype; the f32 upcast happens inside the kernel.
    xt = jnp.pad(x, ((0, n_pad - n), (0, 0))).T.reshape(d, r_total, 128)
    # TODO(synk): for D == 2 the remaining XLA transpose pass could be removed entirely
    # with the interleaved-lane formulation (free (N,2)->(N//64,128) reshape +
    # pltpu.roll), at the cost of an in-kernel lane de-interleave for the output.

    # Weight + bias as SMEM scalars.
    wb = jnp.concatenate([jnp.asarray(weight, jnp.float32).reshape(d),
                          jnp.asarray(bias, jnp.float32).reshape(1)])

    tile_vmem_bytes = bytes_per_row * tile_r
    vmem_limit = int(min(vmem_cap // 2, max(32 * 1024 * 1024, 2 * tile_vmem_bytes)))

    out2d = pl.pallas_call(
        _net_kernel,
        out_shape=jax.ShapeDtypeStruct((r_total, 128), out_dtype),
        grid=(grid_steps,),
        in_specs=[
            pl.BlockSpec(memory_space=pltpu.SMEM),                # (D+1,) scalars
            pl.BlockSpec((d, tile_r, 128), lambda i: (0, i, 0)),  # auto double-buffered
        ],
        out_specs=pl.BlockSpec((tile_r, 128), lambda i: (i, 0)),
        compiler_params=pltpu.CompilerParams(
            dimension_semantics=("parallel",),    # shard batch tiles across TCs (v7x)
            vmem_limit_bytes=vmem_limit,
        ),
        cost_estimate=pl.CostEstimate(
            flops=2 * n * d,
            transcendentals=n,
            bytes_accessed=n * d * x_itemsize + n * out_itemsize,
        ),
    )(wb, xt)

    # Back to the PyTorch (N, 1) layout; for N % 128 == 0 this is a free reshape.
    return out2d.reshape(-1)[:n].reshape(n, 1)


if __name__ == "__main__":
    key = jax.random.PRNGKey(0)
    k1, k2, k3 = jax.random.split(key, 3)

    # Small shapes consistent with the module: batch=8, n_input=2 features, n_output=1.
    N, D = 8, 2
    x = jax.random.normal(k1, (N, D), dtype=jnp.float32)

    # Deterministic parameter init mirroring Net.__init__:
    #   self.l1.weight.data.fill_(1.0); self.l1.bias.data.fill_(1.0)
    weight = jnp.ones((1, D), dtype=jnp.float32)
    bias = jnp.ones((1,), dtype=jnp.float32)

    out = net_forward(x, weight, bias)
    jax.block_until_ready(out)
    ref = jax.nn.sigmoid(x @ weight.T + bias)
    assert out.shape == (N, 1)
    assert jnp.allclose(out, ref, atol=1e-5, rtol=1e-5), (out, ref)

    # Larger batches: 128-multiple padding, multi-step "parallel" grid, and a ragged
    # final block (70000 -> r_total=547 rows, tile_r=72).
    for n_big, kk in ((3000, k2), (70000, k3)):
        xb = jax.random.normal(kk, (n_big, D), dtype=jnp.float32)
        ob = net_forward(xb, weight, bias)
        jax.block_until_ready(ob)
        rb = jax.nn.sigmoid(xb @ weight.T + bias)
        assert ob.shape == (n_big, 1)
        assert jnp.allclose(ob, rb, atol=1e-5, rtol=1e-5)

    print("KERNEL_OK")
</pallas_src>

<mosaic_0001>
module attributes {stable_mosaic.version = 11 : i64} {
  func.func @_net_kernel(%arg0: i32, %arg1: memref<3xf32, #tpu.memory_space<smem>>, %arg2: memref<2x1x128xf32, #tpu.memory_space<vmem>>, %arg3: memref<1x128xf32, #tpu.memory_space<vmem>>) attributes {dimension_semantics = [#tpu.dimension_semantics<parallel>], iteration_bounds = array<i64: 1>, scalar_prefetch = 0 : i64, scratch_operands = 0 : i64, tpu.core_type = #tpu.core_type<tc>, window_params = [{transform_indices = @transform_0, window_bounds = array<i64: 3>}, {transform_indices = @transform_1, window_bounds = array<i64: 2, 1, 128>}, {transform_indices = @transform_2, window_bounds = array<i64: 1, 128>}]} {
    %c0 = arith.constant 0 : index
    %c0_0 = arith.constant 0 : index
    %c0_1 = arith.constant 0 : index
    %0 = vector.load %arg2[%c0, %c0_0, %c0_1] : memref<2x1x128xf32, #tpu.memory_space<vmem>>, vector<1x1x128xf32>
    %1 = vector.shape_cast %0 : vector<1x1x128xf32> to vector<1x128xf32>
    %c0_2 = arith.constant 0 : index
    %2 = memref.load %arg1[%c0_2] : memref<3xf32, #tpu.memory_space<smem>>
    %3 = vector.broadcast %2 : f32 to vector<1x128xf32>
    %4 = arith.mulf %1, %3 : vector<1x128xf32>
    %c1 = arith.constant 1 : index
    %c0_3 = arith.constant 0 : index
    %c0_4 = arith.constant 0 : index
    %5 = vector.load %arg2[%c1, %c0_3, %c0_4] : memref<2x1x128xf32, #tpu.memory_space<vmem>>, vector<1x1x128xf32>
    %6 = vector.shape_cast %5 : vector<1x1x128xf32> to vector<1x128xf32>
    %c1_5 = arith.constant 1 : index
    %7 = memref.load %arg1[%c1_5] : memref<3xf32, #tpu.memory_space<smem>>
    %8 = vector.broadcast %7 : f32 to vector<1x128xf32>
    %9 = arith.mulf %6, %8 : vector<1x128xf32>
    %10 = arith.addf %4, %9 : vector<1x128xf32>
    %c2 = arith.constant 2 : index
    %11 = memref.load %arg1[%c2] : memref<3xf32, #tpu.memory_space<smem>>
    %12 = vector.broadcast %11 : f32 to vector<1x128xf32>
    %13 = arith.addf %10, %12 : vector<1x128xf32>
    %14 = arith.negf %13 : vector<1x128xf32>
    %15 = math.exp %14 : vector<1x128xf32>
    %cst = arith.constant 1.000000e+00 : f32
    %16 = vector.broadcast %cst : f32 to vector<1x128xf32>
    %17 = arith.addf %16, %15 : vector<1x128xf32>
    %18 = arith.divf %16, %17 : vector<1x128xf32>
    %c0_6 = arith.constant 0 : index
    %c0_7 = arith.constant 0 : index
    %19 = vector.load %arg3[%c0_6, %c0_7] : memref<1x128xf32, #tpu.memory_space<vmem>>, vector<1x128xf32>
    tpu.vector_store %arg3[%c0_6, %c0_7], %18 {strides = array<i32>} : memref<1x128xf32, #tpu.memory_space<vmem>>, vector<1x128xf32>,
    return
  }
  func.func @transform_0(%arg0: i32) -> i32 {
    %c0_i32 = arith.constant 0 : i32
    %c0_i32_0 = arith.constant 0 : i32
    return %c0_i32 : i32
  }
  func.func @transform_1(%arg0: i32) -> (i32, i32, i32) {
    %c0_i32 = arith.constant 0 : i32
    %c0_i32_0 = arith.constant 0 : i32
    %c0_i32_1 = arith.constant 0 : i32
    return %c0_i32, %arg0, %c0_i32_0 : i32, i32, i32
  }
  func.func @transform_2(%arg0: i32) -> (i32, i32) {
    %c0_i32 = arith.constant 0 : i32
    %c0_i32_0 = arith.constant 0 : i32
    return %arg0, %c0_i32 : i32, i32
  }
}

</mosaic_0001>

<llo_original>
// kernel: tpu_custom_call.1
$region0: #{tpu_custom_call.1}
  #allocation0 [shape = 'u32[]', space=smem, size = 0x4, offset = 0x4, fixed_abs, tag = 'smem constant byte address 0x4 - core index']
  #allocation1 [shape = 'u32[72,128]{1,0:T(1,128)}', space=vmem, size = 0x9000, scoped, tag = 'internal scratch']
  %s0 = inlined_call_operand.hbm [shape: f32[3], index: 0, kind: input, shape index: {}]
  %s1 = inlined_call_operand.hbm [shape: f32[2,1,128], index: 1, kind: input, shape index: {}]
  %s2 = inlined_call_operand.hbm [shape: f32[1,128], index: 2, kind: output, shape index: {}]
  %s3 = sld [smem:[#allocation0]]
  $region26: #{tpu_custom_call.1} parent=0
    _
  %s5 = ssub.s32 1, %s3
  %s6 = scalar_select 0, %s5, %s3
  $region1: #{tpu_custom_call.1} parent=0
    #allocation2 [shape = 'u8[512]{0}', space=smem, size = 0x200, scoped, tag = 'input window, operand 0, single buffered']
    #allocation3 [shape = 's32[1]{0}', space=sflag, size = 0x4, scoped, tag = 'scoped memory for tpu_custom_call.1']
    #allocation4 [shape = 's32[1]{0}', space=sflag, size = 0x4, scoped, tag = 'scoped memory for tpu_custom_call.1']
    #allocation5 [shape = 's32[1]{0}', space=sflag, size = 0x4, scoped, tag = 'scoped memory for tpu_custom_call.1']
    #allocation6 [shape = 'u8[1024]{0}', space=vmem, size = 0x400, scoped, tag = 'input window, operand 1, single buffered']
    #allocation7 [shape = 'u8[512]{0}', space=vmem, size = 0x400, scoped, tag = 'output window, operand 0, single buffered']
    %7 = vsyncpa [#allocation5], 0
    %8 = vsyncpa [#allocation3], 0
    %9 = vsyncpa [#allocation4], 0
    // Predicated region
    $region2: #{tpu_custom_call.1} parent=1 // pred_check
      _
    $region3: #{tpu_custom_call.1} parent=1 // pred_check_branch
      %11 = sbr.rel (0) target = $region5
    $region4: #{tpu_custom_call.1} parent=1 // pred_region
      %13 = vsyncadd [#allocation5], 0
      %s15 = sshll.u32 %s0, 4
      %s16 = int_to_ptr.hbm [resolvable:$true] %s15
      %18 = dma.hbm_to_smem %s16, 16, [#allocation2], [#allocation5]
    $region5: #{tpu_custom_call.1} parent=1 // pred_fallthru
      _
    // Predicated region
    $region6: #{tpu_custom_call.1} parent=1 // pred_check
      _
    $region7: #{tpu_custom_call.1} parent=1 // pred_check_branch
      %20 = sbr.rel (0) target = $region9
    $region8: #{tpu_custom_call.1} parent=1 // pred_region
      %22 = vsyncadd [#allocation3], 0
      %s23 = sshll.u32 %s1, 4
      %s24 = int_to_ptr.hbm [resolvable:$true] %s23
      %s25 = sshll.u32 [#allocation6], 4
      %s26 = int_to_ptr.vmem [resolvable:$true] %s25
      %31 = dma.hbm_to_vmem [thread:$0]  %s24, 32, %s26, [#allocation3], 16, 16, 1
    $region9: #{tpu_custom_call.1} parent=1 // pred_fallthru
      _
    // Predicated region
    $region10: #{tpu_custom_call.1} parent=1 // pred_check
      _
    $region11: #{tpu_custom_call.1} parent=1 // pred_check_branch
      %33 = sbr.rel (0) target = $region13
    $region12: #{tpu_custom_call.1} parent=1 // pred_region
      %35 = dma.done [#allocation5], 16
    $region13: #{tpu_custom_call.1} parent=1 // pred_fallthru
      _
    // Predicated region
    $region14: #{tpu_custom_call.1} parent=1 // pred_check
      _
    $region15: #{tpu_custom_call.1} parent=1 // pred_check_branch
      %37 = sbr.rel (0) target = $region17
    $region16: #{tpu_custom_call.1} parent=1 // pred_region
      %39 = dma.done [#allocation3], 32
    $region17: #{tpu_custom_call.1} parent=1 // pred_fallthru
      _
    %40 = sfence
    %v41 = vld [vmem:[#allocation6] sm:$0x1]
    %s42 = sld [smem:[#allocation2]]
    %v43 = vstv %s42
    %v44 = vmul.f32 %v41, %v43
    %s45 = scalar_lea.vmem [#allocation6], 1
    %v46 = vld [vmem:[%s45] sm:$0x1]
    %s47 = sld [smem:[#allocation2 + $0x1]]
    %v48 = vstv %s47
    %v49 = vmul.f32 %v46, %v48
    %v50 = vadd.f32 %v44, %v49
    %s51 = sld [smem:[#allocation2 + $0x2]]
    %v52 = vstv %s51
    %v53 = vadd.f32 %v50, %v52
    %v54 = vxor.u32 %v53, 2147483648
    %v55 = vmul.f32 %v54, 1.442695
    %v56 = vpow.pop %v55
    %v57 = vadd.f32 %v56, 1.0
    %v58 = vrcp.pop %v57
    %v59 = vmul.f32 %v57, %v58
    %v60 = vsub.f32 1.0, %v59
    %v61 = vmul.f32 %v58, %v60
    %v62 = vadd.f32 %v58, %v61
    %vm63 = vweird.f32 %v57
    %vm64 = vweird.f32 %v58
    %vm65 = vmor %vm63, %vm64
    %v66 = vsel %vm65, %v58, %v62
    %v67 = vand.u32 2147483647, %v57
    %vm68 = vcmp.eq.f32.partialorder %v67, 8.507059e+37
    %v69 = vand.u32 %v57, 2147483648
    %v70 = vor.u32 1.1754944e-38, %v69
    %v71 = vsel %vm68, %v70, %v66
    %v72 = vmul.f32 1.0, %v71
    %73 = vst [vmem:[#allocation7] sm:$0x1] %v72
    // Predicated region
    $region18: #{tpu_custom_call.1} parent=1 // pred_check
      _
    $region19: #{tpu_custom_call.1} parent=1 // pred_check_branch
      %75 = sbr.rel (0) target = $region21
    $region20: #{tpu_custom_call.1} parent=1 // pred_region
      %77 = vsyncadd [#allocation4], 0
      %s79 = sshll.u32 [#allocation7], 4
      %s80 = int_to_ptr.vmem [resolvable:$true] %s79
      %s81 = sshll.u32 %s2, 4
      %s82 = int_to_ptr.hbm [resolvable:$true] %s81
      %84 = dma.vmem_to_hbm [thread:$0]  %s80, 16, %s82, [#allocation4]
    $region21: #{tpu_custom_call.1} parent=1 // pred_fallthru
      _
    // Predicated region
    $region22: #{tpu_custom_call.1} parent=1 // pred_check
      _
    $region23: #{tpu_custom_call.1} parent=1 // pred_check_branch
      %86 = sbr.rel (0) target = $region25
    $region24: #{tpu_custom_call.1} parent=1 // pred_region
      %88 = dma.done [#allocation4], 16
    $region25: #{tpu_custom_call.1} parent=1 // pred_fallthru
      _
    %89 = vsyncpa [#allocation3], 1
    %90 = vsyncpa [#allocation4], 1
    %91 = vsyncpa [#allocation5], 1

</llo_original>
